<compile_context>
chip_gen: v7x
topology: tpu7x:2x2x1
jax: 0.10.0
libtpu: 0.0.40
codegen_flags: <defaults>
</compile_context>

<pallas_src>
import functools
import math

import jax
import jax.numpy as jnp
from jax.experimental import pallas as pl
from jax.experimental.pallas import tpu as pltpu


# --------------------------------------------------------------------------- #
# US (universally-slimmable) channel arithmetic from the reference module
# --------------------------------------------------------------------------- #
def make_divisible(v, divisor=8, min_value=1):
    # NOTE: the reference module defines min_value=1 (not =divisor).
    if min_value is None:
        min_value = divisor
    new_v = max(min_value, int(v + divisor / 2) // divisor * divisor)
    if new_v < 0.9 * v:
        new_v += divisor
    return new_v


def active_channels(c_max, width_mult, ratio=1):
    # USConv2d channel-slimming rule; PyTorch slicing weight[:k] clamps at c_max.
    return min(c_max, make_divisible(c_max * width_mult / ratio) * ratio)


# --------------------------------------------------------------------------- #
# Kernel
# --------------------------------------------------------------------------- #
def _sepconv_bn_kernel(xp_ref, dw_ref, b1_ref, pw_ref, b2_ref, o_ref, *,
                       K, stride, Ho, Wacc, Cin, Cout, Nb, Wc, n_wchunks):
    """One batch-block of the fused depthwise-separable conv.

    xp_ref : (Nb, Hp, Wpad*Cin)          zero-padded input, lane axis = W*Cin
                                         (Wpad*Cin is a multiple of 128)
    dw_ref : (K*K, Wacc*Cin)             depthwise weights * BN1 scale, W-tiled
    b1_ref : (1, Wacc*Cin)               BN1 bias, W-tiled
    pw_ref : (Wc*stride*Cin, Wc*Cout)    block-diag 1x1 weights * BN2 scale
                                         (one Wo-chunk; shared by all chunks)
    b2_ref : (1, Wc*Cout)                BN2 bias, W-tiled (per chunk)
    o_ref  : (Nb, Ho, Wo*Cout)           lane-dense output slab
    """
    WaccC = Wacc * Cin

    xp = xp_ref[...].astype(jnp.float32)          # (Nb, Hp, Wpad*Cin)
    dwf = dw_ref[...].astype(jnp.float32)         # (K*K, Wacc*Cin)

    # ---- hoisted kw shifts ---------------------------------------------------
    # K lane-shifted copies of the padded row, built ONCE per block (instead of
    # one shift per K*K tap).  These are value slices of a full-lane row, so
    # they lower to a couple of lane rotates that amortize over all K*K MACs.
    shifted = [xp[:, :, kw * Cin: kw * Cin + WaccC] for kw in range(K)]

    # ---- depthwise KxK conv (BN1 scale pre-folded into dwf) -------------------
    # kh (and the H stride) is a sublane-range slice; accumulator is
    # initialized with the first tap.  W decimation (stride>1) is NOT done
    # here -- it is folded into the block-diagonal pointwise weight below.
    hs = (Ho - 1) * stride + 1
    acc = None
    for kh in range(K):
        for kw in range(K):
            if stride == 1:
                rows = shifted[kw][:, kh:kh + Ho, :]           # (Nb, Ho, WaccC)
            else:
                rows = shifted[kw][:, kh:kh + hs:stride, :]    # H-decimated read
            term = rows * dwf[kh * K + kw]
            acc = term if acc is None else acc + term

    # ---- BN1 bias + ReLU6 ------------------------------------------------------
    y1 = jnp.clip(acc + b1_ref[...], 0.0, 6.0)                 # (Nb, Ho, WaccC)
    y1 = y1.reshape(Nb * Ho, WaccC)

    # ---- pointwise 1x1 conv: block-diagonal MXU matmuls over Wo chunks --------
    # Each chunk is one (Nb*Ho, Wc*stride*Cin) x (Wc*stride*Cin, Wc*Cout) matmul
    # landing directly in the lane-dense output layout (no relayout).
    pw = pw_ref[...].astype(jnp.float32)
    b2 = b2_ref[...]
    in_w, out_w = Wc * stride * Cin, Wc * Cout
    for c in range(n_wchunks):
        y2 = jnp.dot(y1[:, c * in_w:(c + 1) * in_w], pw,
                     preferred_element_type=jnp.float32)       # (Nb*Ho, out_w)
        y2 = jnp.clip(y2 + b2, 0.0, 6.0)
        o_ref[:, :, c * out_w:(c + 1) * out_w] = (
            y2.reshape(Nb, Ho, out_w).astype(o_ref.dtype))


# --------------------------------------------------------------------------- #
# Heuristics (generation aware)
# --------------------------------------------------------------------------- #
def _tensorcores_per_chip():
    """Best effort: dual-TC parts (v4/v5p megacore, v7x) want >=2 grid steps so
    the 'parallel' grid axis can be sharded across TensorCores."""
    try:
        kind = jax.devices()[0].device_kind.lower()
    except Exception:
        return 1
    return 2 if any(tag in kind for tag in ("v4", "v5p", "v7")) else 1


def _vmem_limit_bytes(block_bytes, weight_bytes):
    """Scoped-VMEM request: double-buffered I/O blocks + single copy of the
    constant-index weight blocks + slack, capped at 3/4 of physical VMEM."""
    try:
        cap = int(pltpu.get_tpu_info().vmem_capacity_bytes)
    except Exception:
        cap = 64 << 20                    # v7x floor (64 MiB per TensorCore)
    need = 2 * block_bytes + weight_bytes + (4 << 20)
    return int(min((cap * 3) // 4, max(need, 32 << 20)))


def _pick_batch_block(n, per_image_bytes, *, rows_per_image, cores=1,
                      target_bytes=2 << 20, target_mxu_rows=256,
                      max_block_bytes=8 << 20):
    """Largest divisor of n that (a) leaves >= `cores` grid steps on dual-TC
    parts, (b) reaches ~2 MiB of per-step traffic and >=256 matmul rows, and
    (c) stays under a ~8 MiB block so the in-kernel live set doesn't spill."""
    if n <= 1:
        return 1
    cap = n if cores <= 1 else max(1, n // cores)
    want_rows = -(-target_mxu_rows // max(1, rows_per_image))
    want_bytes = max(1, target_bytes // max(1, per_image_bytes))
    hard_cap = max(1, max_block_bytes // max(1, per_image_bytes))
    want = max(1, min(cap, hard_cap, max(want_rows, want_bytes)))
    best = 1
    for d in range(1, n + 1):
        if n % d == 0 and d <= want:
            best = d
    return best


def _pick_wo_chunk(Wo, stride, Cin, Cout, budget_bytes=2 << 20):
    """Largest divisor of Wo whose block-diagonal pointwise weight stays under
    `budget_bytes` (keeps the weight block v7x-VMEM-safe at backbone shapes)."""
    best = 1
    for wc in range(1, Wo + 1):
        if Wo % wc == 0 and (wc * stride * Cin) * (wc * Cout) * 4 <= budget_bytes:
            best = wc
    return best


# --------------------------------------------------------------------------- #
# Wrapper
# --------------------------------------------------------------------------- #
def us_sepconv_bn_nhwc(x_nhwc, params, *, kernel, stride, padding, eps=1e-5,
                       batch_block=None, wo_chunk=None, act_dtype=jnp.float32):
    """Fused USsepconv_bn forward on NHWC activations.

    x_nhwc: (N, H, W, Cin).  Returns (N, Ho, Wo, Cout) in `act_dtype`.
    `act_dtype=jnp.bfloat16` halves HBM traffic (recommended on v6e/v7x);
    weights/bias and all accumulation stay f32.
    """
    N, H, W, Cin = x_nhwc.shape
    K = kernel
    dw = params["dw_weight"]                 # (K, K, Cin)
    pw = params["pw_weight"]                 # (Cin, Cout)
    Cout = pw.shape[1]

    Hp, Wp = H + 2 * padding, W + 2 * padding
    Ho = (Hp - K) // stride + 1
    Wo = (Wp - K) // stride + 1

    # depthwise is evaluated at H-stride resolution on Wacc "candidate" columns;
    # the W decimation is folded into the block-diagonal pointwise weight.
    Wacc = Wo * stride
    WaccC = Wacc * Cin

    # lane-align the flattened (W*Cin) row: pad W so the row is a multiple of
    # 128 lanes -> unmasked full-lane vld/vst.
    step = 128 // math.gcd(Cin, 128)
    Wp_pad = -(-max(Wp, Wacc + K - 1) // step) * step
    WpadC = Wp_pad * Cin

    # ---- fold eval-mode BN into per-channel scale (weights) + bias -----------
    s1 = params["bn1_gamma"] * jax.lax.rsqrt(params["bn1_var"] + eps)
    b1 = params["bn1_beta"] - params["bn1_mean"] * s1
    s2 = params["bn2_gamma"] * jax.lax.rsqrt(params["bn2_var"] + eps)
    b2 = params["bn2_beta"] - params["bn2_mean"] * s2

    dwf = jnp.tile((dw * s1).reshape(K * K, Cin).astype(jnp.float32), (1, Wacc))
    b1t = jnp.tile(b1.astype(jnp.float32), (Wacc,)).reshape(1, WaccC)

    # Block-diagonal pointwise weight (BN2 scale folded), one Wo-chunk of Wc
    # output columns; the same block is reused by every chunk, so its size is
    # independent of Wo.  For stride>1 the column selector also performs the
    # W decimation (only strided input blocks are nonzero).
    Wc = wo_chunk if wo_chunk is not None else _pick_wo_chunk(Wo, stride, Cin, Cout)
    assert Wo % Wc == 0, "wo_chunk must divide Wo"
    n_wchunks = Wo // Wc
    sel = jnp.zeros((Wc * stride, Wc), jnp.float32)
    sel = sel.at[jnp.arange(Wc) * stride, jnp.arange(Wc)].set(1.0)
    pwc = jnp.kron(sel, (pw * s2[None, :]).astype(jnp.float32))
    b2t = jnp.tile(b2.astype(jnp.float32), (Wc,)).reshape(1, Wc * Cout)

    # ---- lane-dense (and lane-aligned) activation layout ----------------------
    xp = jnp.pad(x_nhwc, ((0, 0), (padding, padding),
                          (padding, padding + (Wp_pad - Wp)), (0, 0)))
    xp = xp.reshape(N, Hp, WpadC).astype(act_dtype)

    act_bytes = jnp.dtype(act_dtype).itemsize
    per_image_bytes = act_bytes * (Hp * WpadC + Ho * Wo * Cout)
    Nb = batch_block if batch_block is not None else _pick_batch_block(
        N, per_image_bytes, rows_per_image=Ho, cores=_tensorcores_per_chip())

    # pad the batch if a user-supplied batch_block does not divide N
    N_pad = -(-N // Nb) * Nb
    if N_pad != N:
        xp = jnp.pad(xp, ((0, N_pad - N), (0, 0), (0, 0)))

    weight_bytes = 4 * (dwf.size + b1t.size + pwc.size + b2t.size)
    vmem_limit = _vmem_limit_bytes(Nb * per_image_bytes, weight_bytes)

    kern = functools.partial(
        _sepconv_bn_kernel, K=K, stride=stride, Ho=Ho, Wacc=Wacc,
        Cin=Cin, Cout=Cout, Nb=Nb, Wc=Wc, n_wchunks=n_wchunks)

    out_flat = pl.pallas_call(
        kern,
        out_shape=jax.ShapeDtypeStruct((N_pad, Ho, Wo * Cout), act_dtype),
        grid_spec=pltpu.PrefetchScalarGridSpec(
            num_scalar_prefetch=0,
            grid=(N_pad // Nb,),
            in_specs=[
                pl.BlockSpec((Nb, Hp, WpadC), lambda n: (n, 0, 0)),
                pl.BlockSpec((K * K, WaccC), lambda n: (0, 0)),
                pl.BlockSpec((1, WaccC), lambda n: (0, 0)),
                pl.BlockSpec((Wc * stride * Cin, Wc * Cout), lambda n: (0, 0)),
                pl.BlockSpec((1, Wc * Cout), lambda n: (0, 0)),
            ],
            out_specs=pl.BlockSpec((Nb, Ho, Wo * Cout), lambda n: (n, 0, 0)),
        ),
        compiler_params=pltpu.CompilerParams(
            dimension_semantics=("parallel",),
            vmem_limit_bytes=vmem_limit),
    )(xp, dwf, b1t, pwc, b2t)

    return out_flat[:N].reshape(N, Ho, Wo, Cout)


def us_sepconv_bn(x_nchw, params, *, kernel, stride, padding, width_mult=1.0,
                  **kwargs):
    """Entry point mirroring the PyTorch module (NCHW in / NCHW out)."""
    N, C, H, W = x_nchw.shape
    cin_a = active_channels(C, width_mult)
    cout_a = active_channels(params["pw_weight"].shape[1], width_mult)
    # US channel slicing happens in glue (weight[:out, :in] in PyTorch).
    p = dict(
        dw_weight=params["dw_weight"][:, :, :cin_a],
        pw_weight=params["pw_weight"][:cin_a, :cout_a],
        bn1_gamma=params["bn1_gamma"][:cin_a], bn1_beta=params["bn1_beta"][:cin_a],
        bn1_mean=params["bn1_mean"][:cin_a], bn1_var=params["bn1_var"][:cin_a],
        bn2_gamma=params["bn2_gamma"][:cout_a], bn2_beta=params["bn2_beta"][:cout_a],
        bn2_mean=params["bn2_mean"][:cout_a], bn2_var=params["bn2_var"][:cout_a],
    )
    x_nhwc = jnp.transpose(x_nchw[:, :cin_a], (0, 2, 3, 1))
    y_nhwc = us_sepconv_bn_nhwc(x_nhwc, p, kernel=kernel, stride=stride,
                                padding=padding, **kwargs)
    return jnp.transpose(y_nhwc, (0, 3, 1, 2))


# --------------------------------------------------------------------------- #
# Pure-JAX reference & params
# --------------------------------------------------------------------------- #
def reference_nhwc(x, params, *, kernel, stride, padding, eps=1e-5):
    dw = params["dw_weight"][:, :, None, :]          # (K, K, 1, Cin) HWIO
    y = jax.lax.conv_general_dilated(
        x, dw, window_strides=(stride, stride),
        padding=[(padding, padding), (padding, padding)],
        dimension_numbers=("NHWC", "HWIO", "NHWC"),
        feature_group_count=x.shape[-1])
    s1 = params["bn1_gamma"] / jnp.sqrt(params["bn1_var"] + eps)
    b1 = params["bn1_beta"] - params["bn1_mean"] * s1
    y = jnp.clip(y * s1 + b1, 0.0, 6.0)
    y = jnp.einsum("nhwc,cd->nhwd", y, params["pw_weight"])
    s2 = params["bn2_gamma"] / jnp.sqrt(params["bn2_var"] + eps)
    b2 = params["bn2_beta"] - params["bn2_mean"] * s2
    return jnp.clip(y * s2 + b2, 0.0, 6.0)


def init_params(key, inp, oup, kernel):
    ks = jax.random.split(key, 10)
    return dict(
        # torch depthwise weight (inp, 1, K, K) stored here as (K, K, inp)
        dw_weight=jax.random.normal(ks[0], (kernel, kernel, inp), jnp.float32) * 0.2,
        # torch pointwise weight (oup, inp, 1, 1) stored here as (inp, oup)
        pw_weight=jax.random.normal(ks[1], (inp, oup), jnp.float32) * 0.2,
        bn1_gamma=1.0 + 0.2 * jax.random.normal(ks[2], (inp,), jnp.float32),
        bn1_beta=0.1 * jax.random.normal(ks[3], (inp,), jnp.float32),
        bn1_mean=0.1 * jax.random.normal(ks[4], (inp,), jnp.float32),
        bn1_var=jax.random.uniform(ks[5], (inp,), jnp.float32, 0.5, 1.5),
        bn2_gamma=1.0 + 0.2 * jax.random.normal(ks[6], (oup,), jnp.float32),
        bn2_beta=0.1 * jax.random.normal(ks[7], (oup,), jnp.float32),
        bn2_mean=0.1 * jax.random.normal(ks[8], (oup,), jnp.float32),
        bn2_var=jax.random.uniform(ks[9], (oup,), jnp.float32, 0.5, 1.5),
    )


if __name__ == "__main__":
    # Module config: USsepconv_bn(inp=8, oup=16, kernel=3, stride=1, padding=1, seprelu=True)
    inp, oup, kernel, stride, padding = 8, 16, 3, 1, 1
    N, H, W = 2, 16, 16

    key = jax.random.PRNGKey(0)
    kx, kp = jax.random.split(key)
    x_nchw = jax.random.normal(kx, (N, inp, H, W), jnp.float32)
    params = init_params(kp, inp, oup, kernel)

    # --- main f32 path (exact parity with the PyTorch module) ----------------
    out = us_sepconv_bn(x_nchw, params, kernel=kernel, stride=stride,
                        padding=padding, width_mult=1.0)
    out = jax.block_until_ready(out)

    x_nhwc = jnp.transpose(x_nchw, (0, 2, 3, 1))
    ref = jnp.transpose(
        reference_nhwc(x_nhwc, params, kernel=kernel, stride=stride,
                       padding=padding), (0, 3, 1, 2))
    assert out.shape == (N, oup, H, W)
    err = float(jnp.max(jnp.abs(out - ref)))
    assert jnp.allclose(out, ref, rtol=1e-4, atol=1e-4), err

    # --- exercise the Wo-chunked pointwise path (2 chunks; same numerics) ----
    out_c = us_sepconv_bn_nhwc(x_nhwc, params, kernel=kernel, stride=stride,
                               padding=padding, wo_chunk=8)
    out_c = jax.block_until_ready(out_c)
    err_c = float(jnp.max(jnp.abs(jnp.transpose(out_c, (0, 3, 1, 2)) - ref)))
    assert err_c < 1e-4, err_c

    # --- bf16 activation I/O (v6e/v7x memory-bound win), f32 accumulation ----
    out_bf = us_sepconv_bn_nhwc(x_nhwc, params, kernel=kernel, stride=stride,
                                padding=padding, act_dtype=jnp.bfloat16)
    out_bf = jax.block_until_ready(out_bf)
    err_bf = float(jnp.max(jnp.abs(
        jnp.transpose(out_bf.astype(jnp.float32), (0, 3, 1, 2)) - ref)))
    assert err_bf < 0.15, err_bf

    print("KERNEL_OK")
</pallas_src>

<mosaic_0001>
module attributes {stable_mosaic.version = 11 : i64} {
  func.func @_sepconv_bn_kernel(%arg0: i32, %arg1: memref<2x18x256xf32, #tpu.memory_space<vmem>>, %arg2: memref<9x128xf32, #tpu.memory_space<vmem>>, %arg3: memref<1x128xf32, #tpu.memory_space<vmem>>, %arg4: memref<128x256xf32, #tpu.memory_space<vmem>>, %arg5: memref<1x256xf32, #tpu.memory_space<vmem>>, %arg6: memref<2x16x256xf32, #tpu.memory_space<vmem>>) attributes {dimension_semantics = [#tpu.dimension_semantics<parallel>], iteration_bounds = array<i64: 1>, scalar_prefetch = 0 : i64, scratch_operands = 0 : i64, tpu.core_type = #tpu.core_type<tc>, window_params = [{transform_indices = @transform_0, window_bounds = array<i64: 2, 18, 256>}, {pipeline_mode = #tpu.pipeline_mode<synchronous>, transform_indices = @transform_1, window_bounds = array<i64: 9, 128>}, {pipeline_mode = #tpu.pipeline_mode<synchronous>, transform_indices = @transform_2, window_bounds = array<i64: 1, 128>}, {pipeline_mode = #tpu.pipeline_mode<synchronous>, transform_indices = @transform_3, window_bounds = array<i64: 128, 256>}, {pipeline_mode = #tpu.pipeline_mode<synchronous>, transform_indices = @transform_4, window_bounds = array<i64: 1, 256>}, {transform_indices = @transform_5, window_bounds = array<i64: 2, 16, 256>}]} {
    %c0 = arith.constant 0 : index
    %c0_0 = arith.constant 0 : index
    %c0_1 = arith.constant 0 : index
    %0 = vector.load %arg1[%c0, %c0_0, %c0_1] : memref<2x18x256xf32, #tpu.memory_space<vmem>>, vector<2x18x256xf32>
    %c0_2 = arith.constant 0 : index
    %c0_3 = arith.constant 0 : index
    %1 = vector.load %arg2[%c0_2, %c0_3] : memref<9x128xf32, #tpu.memory_space<vmem>>, vector<9x128xf32>
    %2 = vector.extract_strided_slice %0 {offsets = [0, 0, 0], sizes = [2, 18, 128], strides = [1, 1, 1]} : vector<2x18x256xf32> to vector<2x18x128xf32>
    %3 = vector.extract_strided_slice %0 {offsets = [0, 0, 8], sizes = [2, 18, 128], strides = [1, 1, 1]} : vector<2x18x256xf32> to vector<2x18x128xf32>
    %4 = vector.extract_strided_slice %0 {offsets = [0, 0, 16], sizes = [2, 18, 128], strides = [1, 1, 1]} : vector<2x18x256xf32> to vector<2x18x128xf32>
    %5 = vector.extract_strided_slice %2 {offsets = [0, 0, 0], sizes = [2, 16, 128], strides = [1, 1, 1]} : vector<2x18x128xf32> to vector<2x16x128xf32>
    %6 = vector.extract_strided_slice %1 {offsets = [0, 0], sizes = [1, 128], strides = [1, 1]} : vector<9x128xf32> to vector<1x128xf32>
    %7 = vector.shape_cast %6 : vector<1x128xf32> to vector<128xf32>
    %8 = vector.shape_cast %7 : vector<128xf32> to vector<1x1x128xf32>
    %9 = vector.broadcast %8 : vector<1x1x128xf32> to vector<2x16x128xf32>
    %10 = arith.mulf %5, %9 : vector<2x16x128xf32>
    %11 = vector.extract_strided_slice %3 {offsets = [0, 0, 0], sizes = [2, 16, 128], strides = [1, 1, 1]} : vector<2x18x128xf32> to vector<2x16x128xf32>
    %12 = vector.extract_strided_slice %1 {offsets = [1, 0], sizes = [1, 128], strides = [1, 1]} : vector<9x128xf32> to vector<1x128xf32>
    %13 = vector.shape_cast %12 : vector<1x128xf32> to vector<128xf32>
    %14 = vector.shape_cast %13 : vector<128xf32> to vector<1x1x128xf32>
    %15 = vector.broadcast %14 : vector<1x1x128xf32> to vector<2x16x128xf32>
    %16 = arith.mulf %11, %15 : vector<2x16x128xf32>
    %17 = arith.addf %10, %16 : vector<2x16x128xf32>
    %18 = vector.extract_strided_slice %4 {offsets = [0, 0, 0], sizes = [2, 16, 128], strides = [1, 1, 1]} : vector<2x18x128xf32> to vector<2x16x128xf32>
    %19 = vector.extract_strided_slice %1 {offsets = [2, 0], sizes = [1, 128], strides = [1, 1]} : vector<9x128xf32> to vector<1x128xf32>
    %20 = vector.shape_cast %19 : vector<1x128xf32> to vector<128xf32>
    %21 = vector.shape_cast %20 : vector<128xf32> to vector<1x1x128xf32>
    %22 = vector.broadcast %21 : vector<1x1x128xf32> to vector<2x16x128xf32>
    %23 = arith.mulf %18, %22 : vector<2x16x128xf32>
    %24 = arith.addf %17, %23 : vector<2x16x128xf32>
    %25 = vector.extract_strided_slice %2 {offsets = [0, 1, 0], sizes = [2, 16, 128], strides = [1, 1, 1]} : vector<2x18x128xf32> to vector<2x16x128xf32>
    %26 = vector.extract_strided_slice %1 {offsets = [3, 0], sizes = [1, 128], strides = [1, 1]} : vector<9x128xf32> to vector<1x128xf32>
    %27 = vector.shape_cast %26 : vector<1x128xf32> to vector<128xf32>
    %28 = vector.shape_cast %27 : vector<128xf32> to vector<1x1x128xf32>
    %29 = vector.broadcast %28 : vector<1x1x128xf32> to vector<2x16x128xf32>
    %30 = arith.mulf %25, %29 : vector<2x16x128xf32>
    %31 = arith.addf %24, %30 : vector<2x16x128xf32>
    %32 = vector.extract_strided_slice %3 {offsets = [0, 1, 0], sizes = [2, 16, 128], strides = [1, 1, 1]} : vector<2x18x128xf32> to vector<2x16x128xf32>
    %33 = vector.extract_strided_slice %1 {offsets = [4, 0], sizes = [1, 128], strides = [1, 1]} : vector<9x128xf32> to vector<1x128xf32>
    %34 = vector.shape_cast %33 : vector<1x128xf32> to vector<128xf32>
    %35 = vector.shape_cast %34 : vector<128xf32> to vector<1x1x128xf32>
    %36 = vector.broadcast %35 : vector<1x1x128xf32> to vector<2x16x128xf32>
    %37 = arith.mulf %32, %36 : vector<2x16x128xf32>
    %38 = arith.addf %31, %37 : vector<2x16x128xf32>
    %39 = vector.extract_strided_slice %4 {offsets = [0, 1, 0], sizes = [2, 16, 128], strides = [1, 1, 1]} : vector<2x18x128xf32> to vector<2x16x128xf32>
    %40 = vector.extract_strided_slice %1 {offsets = [5, 0], sizes = [1, 128], strides = [1, 1]} : vector<9x128xf32> to vector<1x128xf32>
    %41 = vector.shape_cast %40 : vector<1x128xf32> to vector<128xf32>
    %42 = vector.shape_cast %41 : vector<128xf32> to vector<1x1x128xf32>
    %43 = vector.broadcast %42 : vector<1x1x128xf32> to vector<2x16x128xf32>
    %44 = arith.mulf %39, %43 : vector<2x16x128xf32>
    %45 = arith.addf %38, %44 : vector<2x16x128xf32>
    %46 = vector.extract_strided_slice %2 {offsets = [0, 2, 0], sizes = [2, 16, 128], strides = [1, 1, 1]} : vector<2x18x128xf32> to vector<2x16x128xf32>
    %47 = vector.extract_strided_slice %1 {offsets = [6, 0], sizes = [1, 128], strides = [1, 1]} : vector<9x128xf32> to vector<1x128xf32>
    %48 = vector.shape_cast %47 : vector<1x128xf32> to vector<128xf32>
    %49 = vector.shape_cast %48 : vector<128xf32> to vector<1x1x128xf32>
    %50 = vector.broadcast %49 : vector<1x1x128xf32> to vector<2x16x128xf32>
    %51 = arith.mulf %46, %50 : vector<2x16x128xf32>
    %52 = arith.addf %45, %51 : vector<2x16x128xf32>
    %53 = vector.extract_strided_slice %3 {offsets = [0, 2, 0], sizes = [2, 16, 128], strides = [1, 1, 1]} : vector<2x18x128xf32> to vector<2x16x128xf32>
    %54 = vector.extract_strided_slice %1 {offsets = [7, 0], sizes = [1, 128], strides = [1, 1]} : vector<9x128xf32> to vector<1x128xf32>
    %55 = vector.shape_cast %54 : vector<1x128xf32> to vector<128xf32>
    %56 = vector.shape_cast %55 : vector<128xf32> to vector<1x1x128xf32>
    %57 = vector.broadcast %56 : vector<1x1x128xf32> to vector<2x16x128xf32>
    %58 = arith.mulf %53, %57 : vector<2x16x128xf32>
    %59 = arith.addf %52, %58 : vector<2x16x128xf32>
    %60 = vector.extract_strided_slice %4 {offsets = [0, 2, 0], sizes = [2, 16, 128], strides = [1, 1, 1]} : vector<2x18x128xf32> to vector<2x16x128xf32>
    %61 = vector.extract_strided_slice %1 {offsets = [8, 0], sizes = [1, 128], strides = [1, 1]} : vector<9x128xf32> to vector<1x128xf32>
    %62 = vector.shape_cast %61 : vector<1x128xf32> to vector<128xf32>
    %63 = vector.shape_cast %62 : vector<128xf32> to vector<1x1x128xf32>
    %64 = vector.broadcast %63 : vector<1x1x128xf32> to vector<2x16x128xf32>
    %65 = arith.mulf %60, %64 : vector<2x16x128xf32>
    %66 = arith.addf %59, %65 : vector<2x16x128xf32>
    %c0_4 = arith.constant 0 : index
    %c0_5 = arith.constant 0 : index
    %67 = vector.load %arg3[%c0_4, %c0_5] : memref<1x128xf32, #tpu.memory_space<vmem>>, vector<1x128xf32>
    %68 = vector.shape_cast %67 : vector<1x128xf32> to vector<1x1x128xf32>
    %69 = vector.broadcast %68 : vector<1x1x128xf32> to vector<2x16x128xf32>
    %70 = arith.addf %66, %69 : vector<2x16x128xf32>
    %cst = arith.constant 0.000000e+00 : f32
    %cst_6 = arith.constant 6.000000e+00 : f32
    %71 = vector.broadcast %cst : f32 to vector<2x16x128xf32>
    %72 = arith.maximumf %71, %70 : vector<2x16x128xf32>
    %73 = vector.broadcast %cst_6 : f32 to vector<2x16x128xf32>
    %74 = arith.minimumf %73, %72 : vector<2x16x128xf32>
    %75 = vector.shape_cast %74 : vector<2x16x128xf32> to vector<32x128xf32>
    %c0_7 = arith.constant 0 : index
    %c0_8 = arith.constant 0 : index
    %76 = vector.load %arg4[%c0_7, %c0_8] : memref<128x256xf32, #tpu.memory_space<vmem>>, vector<128x256xf32>
    %c0_9 = arith.constant 0 : index
    %c0_10 = arith.constant 0 : index
    %77 = vector.load %arg5[%c0_9, %c0_10] : memref<1x256xf32, #tpu.memory_space<vmem>>, vector<1x256xf32>
    %cst_11 = arith.constant dense<0.000000e+00> : vector<32x256xf32>
    %78 = tpu.matmul %75, %76, %cst_11 {dimension_numbers = #tpu.dot_dimension_numbers<[1], [0], [0], [1], [0, 0, 1, 1], [], []>} : vector<32x128xf32>, vector<128x256xf32>, vector<32x256xf32> -> vector<32x256xf32>
    %79 = vector.broadcast %77 : vector<1x256xf32> to vector<32x256xf32>
    %80 = arith.addf %78, %79 : vector<32x256xf32>
    %cst_12 = arith.constant 0.000000e+00 : f32
    %cst_13 = arith.constant 6.000000e+00 : f32
    %81 = vector.broadcast %cst_12 : f32 to vector<32x256xf32>
    %82 = arith.maximumf %81, %80 : vector<32x256xf32>
    %83 = vector.broadcast %cst_13 : f32 to vector<32x256xf32>
    %84 = arith.minimumf %83, %82 : vector<32x256xf32>
    %85 = vector.shape_cast %84 : vector<32x256xf32> to vector<2x16x256xf32>
    %c0_14 = arith.constant 0 : index
    %c0_15 = arith.constant 0 : index
    %c0_16 = arith.constant 0 : index
    %86 = vector.load %arg6[%c0_14, %c0_15, %c0_16] : memref<2x16x256xf32, #tpu.memory_space<vmem>>, vector<2x16x256xf32>
    tpu.vector_store %arg6[%c0_14, %c0_15, %c0_16], %85 {strides = array<i32>} : memref<2x16x256xf32, #tpu.memory_space<vmem>>, vector<2x16x256xf32>,
    return
  }
  func.func @transform_0(%arg0: i32) -> (i32, i32, i32) {
    %c0_i32 = arith.constant 0 : i32
    %c0_i32_0 = arith.constant 0 : i32
    %c0_i32_1 = arith.constant 0 : i32
    return %arg0, %c0_i32, %c0_i32_0 : i32, i32, i32
  }
  func.func @transform_1(%arg0: i32) -> (i32, i32) {
    %c0_i32 = arith.constant 0 : i32
    %c0_i32_0 = arith.constant 0 : i32
    %c0_i32_1 = arith.constant 0 : i32
    return %c0_i32, %c0_i32_0 : i32, i32
  }
  func.func @transform_2(%arg0: i32) -> (i32, i32) {
    %c0_i32 = arith.constant 0 : i32
    %c0_i32_0 = arith.constant 0 : i32
    %c0_i32_1 = arith.constant 0 : i32
    return %c0_i32, %c0_i32_0 : i32, i32
  }
  func.func @transform_3(%arg0: i32) -> (i32, i32) {
    %c0_i32 = arith.constant 0 : i32
    %c0_i32_0 = arith.constant 0 : i32
    %c0_i32_1 = arith.constant 0 : i32
    return %c0_i32, %c0_i32_0 : i32, i32
  }
  func.func @transform_4(%arg0: i32) -> (i32, i32) {
    %c0_i32 = arith.constant 0 : i32
    %c0_i32_0 = arith.constant 0 : i32
    %c0_i32_1 = arith.constant 0 : i32
    return %c0_i32, %c0_i32_0 : i32, i32
  }
  func.func @transform_5(%arg0: i32) -> (i32, i32, i32) {
    %c0_i32 = arith.constant 0 : i32
    %c0_i32_0 = arith.constant 0 : i32
    %c0_i32_1 = arith.constant 0 : i32
    return %arg0, %c0_i32, %c0_i32_0 : i32, i32, i32
  }
}

</mosaic_0001>

<llo_original>
// kernel: tpu_custom_call.1
$region0: #{tpu_custom_call.1}
  #allocation0 [shape = 'u32[]', space=smem, size = 0x4, offset = 0x4, fixed_abs, tag = 'smem constant byte address 0x4 - core index']
  #allocation1 [shape = 'u32[144,128]{1,0:T(1,128)}', space=vmem, size = 0x12000, scoped, tag = 'internal scratch']
  %s0 = inlined_call_operand.vmem [shape: f32[2,18,256], index: 0, kind: input, shape index: {}]
  %s1 = inlined_call_operand.vmem [shape: f32[9,128], index: 1, kind: input, shape index: {}]
  %s2 = inlined_call_operand.vmem [shape: f32[1,128], index: 2, kind: input, shape index: {}]
  %s3 = inlined_call_operand.hbm [shape: f32[128,256], index: 3, kind: input, shape index: {}]
  %s4 = inlined_call_operand.vmem [shape: f32[1,256], index: 4, kind: input, shape index: {}]
  %s5 = inlined_call_operand.hbm [shape: f32[2,16,256], index: 5, kind: output, shape index: {}]
  %s6 = sld [smem:[#allocation0]]
  $region34: #{tpu_custom_call.1} parent=0
    _
  %s8 = ssub.s32 1, %s6
  %s9 = scalar_select 0, %s8, %s6
  $region1: #{tpu_custom_call.1} parent=0
    #allocation2 [shape = 'u8[131072]{0}', space=vmem, size = 0x20000, scoped, tag = 'input window, operand 3, single buffered']
    #allocation3 [shape = 's32[1]{0}', space=sflag, size = 0x4, scoped, tag = 'scoped memory for tpu_custom_call.1']
    #allocation4 [shape = 's32[1]{0}', space=sflag, size = 0x4, scoped, tag = 'scoped memory for tpu_custom_call.1']
    #allocation5 [shape = 'u8[32768]{0}', space=vmem, size = 0x8000, scoped, tag = 'output window, operand 0, single buffered']
    %10 = vsyncpa [#allocation3], 0
    %11 = vsyncpa [#allocation4], 0
    // Predicated region
    $region2: #{tpu_custom_call.1} parent=1 // pred_check
      _
    $region3: #{tpu_custom_call.1} parent=1 // pred_check_branch
      %13 = sbr.rel (0) target = $region5
    $region4: #{tpu_custom_call.1} parent=1 // pred_region
      _
    $region5: #{tpu_custom_call.1} parent=1 // pred_fallthru
      _
    // Predicated region
    $region6: #{tpu_custom_call.1} parent=1 // pred_check
      _
    $region7: #{tpu_custom_call.1} parent=1 // pred_check_branch
      %15 = sbr.rel (0) target = $region9
    $region8: #{tpu_custom_call.1} parent=1 // pred_region
      _
    $region9: #{tpu_custom_call.1} parent=1 // pred_fallthru
      _
    // Predicated region
    $region10: #{tpu_custom_call.1} parent=1 // pred_check
      _
    $region11: #{tpu_custom_call.1} parent=1 // pred_check_branch
      %17 = sbr.rel (0) target = $region13
    $region12: #{tpu_custom_call.1} parent=1 // pred_region
      _
    $region13: #{tpu_custom_call.1} parent=1 // pred_fallthru
      _
    // Predicated region
    $region14: #{tpu_custom_call.1} parent=1 // pred_check
      _
    $region15: #{tpu_custom_call.1} parent=1 // pred_check_branch
      %19 = sbr.rel (0) target = $region17
    $region16: #{tpu_custom_call.1} parent=1 // pred_region
      %s21 = ssub.s32 4096, 4096
      %22 = vsyncadd [#allocation3], %s21
      %s23 = sshll.u32 [#allocation2], 4
      %s24 = int_to_ptr.vmem [resolvable:$true] %s23
      %29 = dma.hbm_to_vmem [thread:$0]  %s3, 4096, %s24, [#allocation3], 256, 256, 16
    $region17: #{tpu_custom_call.1} parent=1 // pred_fallthru
      _
    // Predicated region
    $region18: #{tpu_custom_call.1} parent=1 // pred_check
      _
    $region19: #{tpu_custom_call.1} parent=1 // pred_check_branch
      %31 = sbr.rel (0) target = $region21
    $region20: #{tpu_custom_call.1} parent=1 // pred_region
      _
    $region21: #{tpu_custom_call.1} parent=1 // pred_fallthru
      _
    // Predicated region
    $region22: #{tpu_custom_call.1} parent=1 // pred_check
      _
    $region23: #{tpu_custom_call.1} parent=1 // pred_check_branch
      %33 = sbr.rel (0) target = $region25
    $region24: #{tpu_custom_call.1} parent=1 // pred_region
      %34 = dma.done [#allocation3], 4096
    $region25: #{tpu_custom_call.1} parent=1 // pred_fallthru
      _
    %v35 = vld [vmem:[%s0] sm:$0xff]
    %v36 = vld [vmem:[%s0 + $0x8] sm:$0xff]
    %v37 = vld [vmem:[%s0 + $0x10] sm:$0xff]
    %v38 = vld [vmem:[%s0 + $0x18] sm:$0xff]
    %v39 = vld [vmem:[%s0 + $0x20] sm:$0x3]
    %v40 = vld [vmem:[%s0 + $0x28] sm:$0x3]
    %v41 = vld [vmem:[%s0 + $0x30] sm:$0xff]
    %v42 = vld [vmem:[%s0 + $0x38] sm:$0xff]
    %v43 = vld [vmem:[%s0 + $0x40] sm:$0xff]
    %v44 = vld [vmem:[%s0 + $0x48] sm:$0xff]
    %v45 = vld [vmem:[%s0 + $0x50] sm:$0x3]
    %v46 = vld [vmem:[%s0 + $0x58] sm:$0x3]
    %v47 = vld [vmem:[%s1] sm:$0xff]
    %v48 = vld [vmem:[%s1 + $0x8] sm:$0x1]
    %v49 = vlaneseq
    %v50 = vshrl.u32 %v49, 7
    %v51 = vsub.s32 0, %v50
    %v52 = vrot.slane %v47, %v51
    %v53 = vmul.f32 %v35, %v52
    %v54 = vmul.f32 %v37, %v52
    %v55 = vmul.f32 %v41, %v52
    %v56 = vmul.f32 %v43, %v52
    %v57 = vlaneseq
    %v58 = vshrl.u32 %v57, 7
    %v59 = vsub.s32 1, %v58
    %v60 = vrot.slane %v47, %v59
    %62 = vrot.lane.b32.xlu0 %v60, 8
    %v63 = vpop.permute.xlu0 %62
    %v65 = vmul.f32 %v35, %v63
    %v66 = vmul.f32 %v36, %v63
    %v67 = vmul.f32 %v37, %v63
    %v68 = vmul.f32 %v38, %v63
    %v69 = vmul.f32 %v41, %v63
    %v70 = vmul.f32 %v42, %v63
    %v71 = vmul.f32 %v43, %v63
    %v72 = vmul.f32 %v44, %v63
    %81 = vrot.lane.b32.xlu0 %v65, 120
    %v82 = vpop.permute.xlu0 %81
    %83 = vrot.lane.b32.xlu0 %v66, 120
    %v84 = vpop.permute.xlu0 %83
    %85 = vrot.lane.b32.xlu0 %v67, 120
    %v86 = vpop.permute.xlu0 %85
    %87 = vrot.lane.b32.xlu0 %v68, 120
    %v88 = vpop.permute.xlu0 %87
    %89 = vrot.lane.b32.xlu0 %v69, 120
    %v90 = vpop.permute.xlu0 %89
    %91 = vrot.lane.b32.xlu0 %v70, 120
    %v92 = vpop.permute.xlu0 %91
    %93 = vrot.lane.b32.xlu0 %v71, 120
    %v94 = vpop.permute.xlu0 %93
    %95 = vrot.lane.b32.xlu0 %v72, 120
    %v96 = vpop.permute.xlu0 %95
    %vm97 = vcmask 982016
    %v98 = vsel %vm97, %v82, %v84
    %v99 = vsel %vm97, %v86, %v88
    %v100 = vsel %vm97, %v90, %v92
    %v101 = vsel %vm97, %v94, %v96
    %v106 = vadd.f32 %v53, %v98
    %v107 = vadd.f32 %v54, %v99
    %v108 = vadd.f32 %v55, %v100
    %v109 = vadd.f32 %v56, %v101
    %v110 = vlaneseq
    %v111 = vshrl.u32 %v110, 7
    %v112 = vsub.s32 2, %v111
    %v113 = vrot.slane %v47, %v112
    %115 = vrot.lane.b32.xlu0 %v113, 16
    %v116 = vpop.permute.xlu0 %115
    %v118 = vmul.f32 %v35, %v116
    %v119 = vmul.f32 %v36, %v116
    %v120 = vmul.f32 %v37, %v116
    %v121 = vmul.f32 %v38, %v116
    %v122 = vmul.f32 %v41, %v116
    %v123 = vmul.f32 %v42, %v116
    %v124 = vmul.f32 %v43, %v116
    %v125 = vmul.f32 %v44, %v116
    %134 = vrot.lane.b32.xlu0 %v118, 112
    %v135 = vpop.permute.xlu0 %134
    %136 = vrot.lane.b32.xlu0 %v119, 112
    %v137 = vpop.permute.xlu0 %136
    %138 = vrot.lane.b32.xlu0 %v120, 112
    %v139 = vpop.permute.xlu0 %138
    %140 = vrot.lane.b32.xlu0 %v121, 112
    %v141 = vpop.permute.xlu0 %140
    %142 = vrot.lane.b32.xlu0 %v122, 112
    %v143 = vpop.permute.xlu0 %142
    %144 = vrot.lane.b32.xlu0 %v123, 112
    %v145 = vpop.permute.xlu0 %144
    %146 = vrot.lane.b32.xlu0 %v124, 112
    %v147 = vpop.permute.xlu0 %146
    %148 = vrot.lane.b32.xlu0 %v125, 112
    %v149 = vpop.permute.xlu0 %148
    %vm150 = vcmask 916480
    %v151 = vsel %vm150, %v135, %v137
    %v152 = vsel %vm150, %v139, %v141
    %v153 = vsel %vm150, %v143, %v145
    %v154 = vsel %vm150, %v147, %v149
    %v159 = vadd.f32 %v106, %v151
    %v160 = vadd.f32 %v107, %v152
    %v161 = vadd.f32 %v108, %v153
    %v162 = vadd.f32 %v109, %v154
    %v163 = vlaneseq
    %v164 = vshrl.u32 %v163, 7
    %v165 = vsub.s32 3, %v164
    %v166 = vrot.slane %v47, %v165
    %v167 = vmul.f32 %v35, %v166
    %v168 = vmul.f32 %v37, %v166
    %v169 = vmul.f32 %v39, %v166
    %v170 = vmul.f32 %v41, %v166
    %v171 = vmul.f32 %v43, %v166
    %v172 = vmul.f32 %v45, %v166
    %vm179 = vcmask 1046528
    %v180 = vrot.slane %v167, 1
    %v181 = vrot.slane %v168, 1
    %v182 = vsel %vm179, %v180, %v181
    %v183 = vrot.slane %v169, 1
    %v184 = vsel %vm179, %v181, %v183
    %v185 = vrot.slane %v170, 1
    %v186 = vrot.slane %v171, 1
    %v187 = vsel %vm179, %v185, %v186
    %v188 = vrot.slane %v172, 1
    %v189 = vsel %vm179, %v186, %v188
    %v194 = vadd.f32 %v159, %v182
    %v195 = vadd.f32 %v160, %v184
    %v196 = vadd.f32 %v161, %v187
    %v197 = vadd.f32 %v162, %v189
    %v198 = vlaneseq
    %v199 = vshrl.u32 %v198, 7
    %v200 = vsub.s32 4, %v199
    %v201 = vrot.slane %v47, %v200
    %203 = vrot.lane.b32.xlu0 %v201, 8
    %v204 = vpop.permute.xlu0 %203
    %v206 = vmul.f32 %v35, %v204
    %v207 = vmul.f32 %v36, %v204
    %v208 = vmul.f32 %v37, %v204
    %v209 = vmul.f32 %v38, %v204
    %v210 = vmul.f32 %v39, %v204
    %v211 = vmul.f32 %v40, %v204
    %v212 = vmul.f32 %v41, %v204
    %v213 = vmul.f32 %v42, %v204
    %v214 = vmul.f32 %v43, %v204
    %v215 = vmul.f32 %v44, %v204
    %v216 = vmul.f32 %v45, %v204
    %v217 = vmul.f32 %v46, %v204
    %v230 = vrot.slane %v206, 1
    %v231 = vrot.slane %v208, 1
    %v232 = vsel %vm179, %v230, %v231
    %v233 = vrot.slane %v207, 1
    %v234 = vrot.slane %v209, 1
    %v235 = vsel %vm179, %v233, %v234
    %v236 = vrot.slane %v210, 1
    %v237 = vsel %vm179, %v231, %v236
    %v238 = vrot.slane %v211, 1
    %v239 = vsel %vm179, %v234, %v238
    %v240 = vrot.slane %v212, 1
    %v241 = vrot.slane %v214, 1
    %v242 = vsel %vm179, %v240, %v241
    %v243 = vrot.slane %v213, 1
    %v244 = vrot.slane %v215, 1
    %v245 = vsel %vm179, %v243, %v244
    %v246 = vrot.slane %v216, 1
    %v247 = vsel %vm179, %v241, %v246
    %v248 = vrot.slane %v217, 1
    %v249 = vsel %vm179, %v244, %v248
    %250 = vrot.lane.b32.xlu0 %v232, 120
    %v251 = vpop.permute.xlu0 %250
    %252 = vrot.lane.b32.xlu0 %v235, 120
    %v253 = vpop.permute.xlu0 %252
    %254 = vrot.lane.b32.xlu0 %v237, 120
    %v255 = vpop.permute.xlu0 %254
    %256 = vrot.lane.b32.xlu0 %v239, 120
    %v257 = vpop.permute.xlu0 %256
    %258 = vrot.lane.b32.xlu0 %v242, 120
    %v259 = vpop.permute.xlu0 %258
    %260 = vrot.lane.b32.xlu0 %v245, 120
    %v261 = vpop.permute.xlu0 %260
    %262 = vrot.lane.b32.xlu0 %v247, 120
    %v263 = vpop.permute.xlu0 %262
    %264 = vrot.lane.b32.xlu0 %v249, 120
    %v265 = vpop.permute.xlu0 %264
    %v266 = vsel %vm97, %v251, %v253
    %v267 = vsel %vm97, %v255, %v257
    %v268 = vsel %vm97, %v259, %v261
    %v269 = vsel %vm97, %v263, %v265
    %v274 = vadd.f32 %v194, %v266
    %v275 = vadd.f32 %v195, %v267
    %v276 = vadd.f32 %v196, %v268
    %v277 = vadd.f32 %v197, %v269
    %v278 = vlaneseq
    %v279 = vshrl.u32 %v278, 7
    %v280 = vsub.s32 5, %v279
    %v281 = vrot.slane %v47, %v280
    %283 = vrot.lane.b32.xlu0 %v281, 16
    %v284 = vpop.permute.xlu0 %283
    %v286 = vmul.f32 %v35, %v284
    %v287 = vmul.f32 %v36, %v284
    %v288 = vmul.f32 %v37, %v284
    %v289 = vmul.f32 %v38, %v284
    %v290 = vmul.f32 %v39, %v284
    %v291 = vmul.f32 %v40, %v284
    %v292 = vmul.f32 %v41, %v284
    %v293 = vmul.f32 %v42, %v284
    %v294 = vmul.f32 %v43, %v284
    %v295 = vmul.f32 %v44, %v284
    %v296 = vmul.f32 %v45, %v284
    %v297 = vmul.f32 %v46, %v284
    %v310 = vrot.slane %v286, 1
    %v311 = vrot.slane %v288, 1
    %v312 = vsel %vm179, %v310, %v311
    %v313 = vrot.slane %v287, 1
    %v314 = vrot.slane %v289, 1
    %v315 = vsel %vm179, %v313, %v314
    %v316 = vrot.slane %v290, 1
    %v317 = vsel %vm179, %v311, %v316
    %v318 = vrot.slane %v291, 1
    %v319 = vsel %vm179, %v314, %v318
    %v320 = vrot.slane %v292, 1
    %v321 = vrot.slane %v294, 1
    %v322 = vsel %vm179, %v320, %v321
    %v323 = vrot.slane %v293, 1
    %v324 = vrot.slane %v295, 1
    %v325 = vsel %vm179, %v323, %v324
    %v326 = vrot.slane %v296, 1
    %v327 = vsel %vm179, %v321, %v326
    %v328 = vrot.slane %v297, 1
    %v329 = vsel %vm179, %v324, %v328
    %330 = vrot.lane.b32.xlu0 %v312, 112
    %v331 = vpop.permute.xlu0 %330
    %332 = vrot.lane.b32.xlu0 %v315, 112
    %v333 = vpop.permute.xlu0 %332
    %334 = vrot.lane.b32.xlu0 %v317, 112
    %v335 = vpop.permute.xlu0 %334
    %336 = vrot.lane.b32.xlu0 %v319, 112
    %v337 = vpop.permute.xlu0 %336
    %338 = vrot.lane.b32.xlu0 %v322, 112
    %v339 = vpop.permute.xlu0 %338
    %340 = vrot.lane.b32.xlu0 %v325, 112
    %v341 = vpop.permute.xlu0 %340
    %342 = vrot.lane.b32.xlu0 %v327, 112
    %v343 = vpop.permute.xlu0 %342
    %344 = vrot.lane.b32.xlu0 %v329, 112
    %v345 = vpop.permute.xlu0 %344
    %v346 = vsel %vm150, %v331, %v333
    %v347 = vsel %vm150, %v335, %v337
    %v348 = vsel %vm150, %v339, %v341
    %v349 = vsel %vm150, %v343, %v345
    %v354 = vadd.f32 %v274, %v346
    %v355 = vadd.f32 %v275, %v347
    %v356 = vadd.f32 %v276, %v348
    %v357 = vadd.f32 %v277, %v349
    %v358 = vlaneseq
    %v359 = vshrl.u32 %v358, 7
    %v360 = vsub.s32 6, %v359
    %v361 = vrot.slane %v47, %v360
    %v362 = vmul.f32 %v35, %v361
    %v363 = vmul.f32 %v37, %v361
    %v364 = vmul.f32 %v39, %v361
    %v365 = vmul.f32 %v41, %v361
    %v366 = vmul.f32 %v43, %v361
    %v367 = vmul.f32 %v45, %v361
    %vm374 = vcmask 1045504
    %v375 = vrot.slane %v362, 2
    %v376 = vrot.slane %v363, 2
    %v377 = vsel %vm374, %v375, %v376
    %v378 = vrot.slane %v364, 2
    %v379 = vsel %vm374, %v376, %v378
    %v380 = vrot.slane %v365, 2
    %v381 = vrot.slane %v366, 2
    %v382 = vsel %vm374, %v380, %v381
    %v383 = vrot.slane %v367, 2
    %v384 = vsel %vm374, %v381, %v383
    %v389 = vadd.f32 %v354, %v377
    %v390 = vadd.f32 %v355, %v379
    %v391 = vadd.f32 %v356, %v382
    %v392 = vadd.f32 %v357, %v384
    %v393 = vlaneseq
    %v394 = vshrl.u32 %v393, 7
    %v395 = vsub.s32 7, %v394
    %v396 = vrot.slane %v47, %v395
    %398 = vrot.lane.b32.xlu0 %v396, 8
    %v399 = vpop.permute.xlu0 %398
    %v401 = vmul.f32 %v35, %v399
    %v402 = vmul.f32 %v36, %v399
    %v403 = vmul.f32 %v37, %v399
    %v404 = vmul.f32 %v38, %v399
    %v405 = vmul.f32 %v39, %v399
    %v406 = vmul.f32 %v40, %v399
    %v407 = vmul.f32 %v41, %v399
    %v408 = vmul.f32 %v42, %v399
    %v409 = vmul.f32 %v43, %v399
    %v410 = vmul.f32 %v44, %v399
    %v411 = vmul.f32 %v45, %v399
    %v412 = vmul.f32 %v46, %v399
    %v425 = vrot.slane %v401, 2
    %v426 = vrot.slane %v403, 2
    %v427 = vsel %vm374, %v425, %v426
    %v428 = vrot.slane %v402, 2
    %v429 = vrot.slane %v404, 2
    %v430 = vsel %vm374, %v428, %v429
    %v431 = vrot.slane %v405, 2
    %v432 = vsel %vm374, %v426, %v431
    %v433 = vrot.slane %v406, 2
    %v434 = vsel %vm374, %v429, %v433
    %v435 = vrot.slane %v407, 2
    %v436 = vrot.slane %v409, 2
    %v437 = vsel %vm374, %v435, %v436
    %v438 = vrot.slane %v408, 2
    %v439 = vrot.slane %v410, 2
    %v440 = vsel %vm374, %v438, %v439
    %v441 = vrot.slane %v411, 2
    %v442 = vsel %vm374, %v436, %v441
    %v443 = vrot.slane %v412, 2
    %v444 = vsel %vm374, %v439, %v443
    %445 = vrot.lane.b32.xlu0 %v427, 120
    %v446 = vpop.permute.xlu0 %445
    %447 = vrot.lane.b32.xlu0 %v430, 120
    %v448 = vpop.permute.xlu0 %447
    %449 = vrot.lane.b32.xlu0 %v432, 120
    %v450 = vpop.permute.xlu0 %449
    %451 = vrot.lane.b32.xlu0 %v434, 120
    %v452 = vpop.permute.xlu0 %451
    %453 = vrot.lane.b32.xlu0 %v437, 120
    %v454 = vpop.permute.xlu0 %453
    %455 = vrot.lane.b32.xlu0 %v440, 120
    %v456 = vpop.permute.xlu0 %455
    %457 = vrot.lane.b32.xlu0 %v442, 120
    %v458 = vpop.permute.xlu0 %457
    %459 = vrot.lane.b32.xlu0 %v444, 120
    %v460 = vpop.permute.xlu0 %459
    %v461 = vsel %vm97, %v446, %v448
    %v462 = vsel %vm97, %v450, %v452
    %v463 = vsel %vm97, %v454, %v456
    %v464 = vsel %vm97, %v458, %v460
    %v469 = vadd.f32 %v389, %v461
    %v470 = vadd.f32 %v390, %v462
    %v471 = vadd.f32 %v391, %v463
    %v472 = vadd.f32 %v392, %v464
    %v473 = vlaneseq
    %v474 = vshrl.u32 %v473, 7
    %v475 = vsub.s32 0, %v474
    %v476 = vrot.slane %v48, %v475
    %478 = vrot.lane.b32.xlu0 %v476, 16
    %v479 = vpop.permute.xlu0 %478
    %v481 = vmul.f32 %v35, %v479
    %v482 = vmul.f32 %v36, %v479
    %v483 = vmul.f32 %v37, %v479
    %v484 = vmul.f32 %v38, %v479
    %v485 = vmul.f32 %v39, %v479
    %v486 = vmul.f32 %v40, %v479
    %v487 = vmul.f32 %v41, %v479
    %v488 = vmul.f32 %v42, %v479
    %v489 = vmul.f32 %v43, %v479
    %v490 = vmul.f32 %v44, %v479
    %v491 = vmul.f32 %v45, %v479
    %v492 = vmul.f32 %v46, %v479
    %v505 = vrot.slane %v481, 2
    %v506 = vrot.slane %v483, 2
    %v507 = vsel %vm374, %v505, %v506
    %v508 = vrot.slane %v482, 2
    %v509 = vrot.slane %v484, 2
    %v510 = vsel %vm374, %v508, %v509
    %v511 = vrot.slane %v485, 2
    %v512 = vsel %vm374, %v506, %v511
    %v513 = vrot.slane %v486, 2
    %v514 = vsel %vm374, %v509, %v513
    %v515 = vrot.slane %v487, 2
    %v516 = vrot.slane %v489, 2
    %v517 = vsel %vm374, %v515, %v516
    %v518 = vrot.slane %v488, 2
    %v519 = vrot.slane %v490, 2
    %v520 = vsel %vm374, %v518, %v519
    %v521 = vrot.slane %v491, 2
    %v522 = vsel %vm374, %v516, %v521
    %v523 = vrot.slane %v492, 2
    %v524 = vsel %vm374, %v519, %v523
    %525 = vrot.lane.b32.xlu0 %v507, 112
    %v526 = vpop.permute.xlu0 %525
    %527 = vrot.lane.b32.xlu0 %v510, 112
    %v528 = vpop.permute.xlu0 %527
    %529 = vrot.lane.b32.xlu0 %v512, 112
    %v530 = vpop.permute.xlu0 %529
    %531 = vrot.lane.b32.xlu0 %v514, 112
    %v532 = vpop.permute.xlu0 %531
    %533 = vrot.lane.b32.xlu0 %v517, 112
    %v534 = vpop.permute.xlu0 %533
    %535 = vrot.lane.b32.xlu0 %v520, 112
    %v536 = vpop.permute.xlu0 %535
    %537 = vrot.lane.b32.xlu0 %v522, 112
    %v538 = vpop.permute.xlu0 %537
    %539 = vrot.lane.b32.xlu0 %v524, 112
    %v540 = vpop.permute.xlu0 %539
    %v541 = vsel %vm150, %v526, %v528
    %v542 = vsel %vm150, %v530, %v532
    %v543 = vsel %vm150, %v534, %v536
    %v544 = vsel %vm150, %v538, %v540
    %v549 = vadd.f32 %v469, %v541
    %v550 = vadd.f32 %v470, %v542
    %v551 = vadd.f32 %v471, %v543
    %v552 = vadd.f32 %v472, %v544
    %v553 = vld [vmem:[%s2] sm:$0x1]
    %v555 = vlaneseq
    %v556 = vshrl.u32 %v555, 7
    %v557 = vsub.s32 0, %v556
    %v558 = vrot.slane %v553, %v557
    %v560 = vadd.f32 %v549, %v558
    %v561 = vadd.f32 %v550, %v558
    %v562 = vadd.f32 %v551, %v558
    %v563 = vadd.f32 %v552, %v558
    %v564 = vmax.f32 %v560, 0.0
    %v565 = vmax.f32 %v561, 0.0
    %v566 = vmax.f32 %v562, 0.0
    %v567 = vmax.f32 %v563, 0.0
    %v568 = vmin.f32 %v564, 6.0
    %v569 = vmin.f32 %v565, 6.0
    %v570 = vmin.f32 %v566, 6.0
    %v571 = vmin.f32 %v567, 6.0
    %v572 = vld [vmem:[#allocation2] sm:$0xff]
    %v573 = vld [vmem:[#allocation2 + $0x8] sm:$0xff]
    %v574 = vld [vmem:[#allocation2 + $0x10] sm:$0xff]
    %v575 = vld [vmem:[#allocation2 + $0x18] sm:$0xff]
    %v576 = vld [vmem:[#allocation2 + $0x20] sm:$0xff]
    %v577 = vld [vmem:[#allocation2 + $0x28] sm:$0xff]
    %v578 = vld [vmem:[#allocation2 + $0x30] sm:$0xff]
    %v579 = vld [vmem:[#allocation2 + $0x38] sm:$0xff]
    %v580 = vld [vmem:[#allocation2 + $0x40] sm:$0xff]
    %v581 = vld [vmem:[#allocation2 + $0x48] sm:$0xff]
    %v582 = vld [vmem:[#allocation2 + $0x50] sm:$0xff]
    %v583 = vld [vmem:[#allocation2 + $0x58] sm:$0xff]
    %v584 = vld [vmem:[#allocation2 + $0x60] sm:$0xff]
    %v585 = vld [vmem:[#allocation2 + $0x68] sm:$0xff]
    %v586 = vld [vmem:[#allocation2 + $0x70] sm:$0xff]
    %v587 = vld [vmem:[#allocation2 + $0x78] sm:$0xff]
    %v588 = vld [vmem:[#allocation2 + $0x80] sm:$0xff]
    %v589 = vld [vmem:[#allocation2 + $0x88] sm:$0xff]
    %v590 = vld [vmem:[#allocation2 + $0x90] sm:$0xff]
    %v591 = vld [vmem:[#allocation2 + $0x98] sm:$0xff]
    %v592 = vld [vmem:[#allocation2 + $0xa0] sm:$0xff]
    %v593 = vld [vmem:[#allocation2 + $0xa8] sm:$0xff]
    %v594 = vld [vmem:[#allocation2 + $0xb0] sm:$0xff]
    %v595 = vld [vmem:[#allocation2 + $0xb8] sm:$0xff]
    %v596 = vld [vmem:[#allocation2 + $0xc0] sm:$0xff]
    %v597 = vld [vmem:[#allocation2 + $0xc8] sm:$0xff]
    %v598 = vld [vmem:[#allocation2 + $0xd0] sm:$0xff]
    %v599 = vld [vmem:[#allocation2 + $0xd8] sm:$0xff]
    %v600 = vld [vmem:[#allocation2 + $0xe0] sm:$0xff]
    %v601 = vld [vmem:[#allocation2 + $0xe8] sm:$0xff]
    %v602 = vld [vmem:[#allocation2 + $0xf0] sm:$0xff]
    %v603 = vld [vmem:[#allocation2 + $0xf8] sm:$0xff]
    %v604 = vld [vmem:[%s4] sm:$0x3]
    %v606 = vlaneseq
    %v607 = vshrl.u32 %v606, 7
    %v608 = vsub.s32 0, %v607
    %v609 = vrot.slane %v604, %v608
    %v610 = vlaneseq
    %v611 = vshrl.u32 %v610, 7
    %v612 = vsub.s32 1, %v611
    %v613 = vrot.slane %v604, %v612
    %616 = vmatprep.subr.mxu0 %v573
    %617 = vmatpush1.msra.mxu0 %v572
    %618 = vmatprep.subr.mxu0 %v575
    %619 = vmatpush1.msra.mxu0 %v574
    %620 = vmatprep.subr.mxu0 %v577
    %621 = vmatpush1.msra.mxu0 %v576
    %622 = vmatprep.subr.mxu0 %v579
    %623 = vmatpush1.msra.mxu0 %v578
    %624 = vmatprep.subr.mxu0 %v581
    %625 = vmatpush1.msra.mxu0 %v580
    %626 = vmatprep.subr.mxu0 %v583
    %627 = vmatpush1.msra.mxu0 %v582
    %628 = vmatprep.subr.mxu0 %v585
    %629 = vmatpush1.msra.mxu0 %v584
    %630 = vmatprep.subr.mxu0 %v587
    %631 = vmatpush1.msra.mxu0 %v586
    %632 = vmatprep.subr.mxu0 %v589
    %633 = vmatpush1.msra.mxu0 %v588
    %634 = vmatprep.subr.mxu0 %v591
    %635 = vmatpush1.msra.mxu0 %v590
    %636 = vmatprep.subr.mxu0 %v593
    %637 = vmatpush1.msra.mxu0 %v592
    %638 = vmatprep.subr.mxu0 %v595
    %639 = vmatpush1.msra.mxu0 %v594
    %640 = vmatprep.subr.mxu0 %v597
    %641 = vmatpush1.msra.mxu0 %v596
    %642 = vmatprep.subr.mxu0 %v599
    %643 = vmatpush1.msra.mxu0 %v598
    %644 = vmatprep.subr.mxu0 %v601
    %645 = vmatpush1.msra.mxu0 %v600
    %646 = vmatprep.subr.mxu0 %v603
    %647 = vmatpush1.msra.mxu0 %v602
    %648 = vmatprep.subr.mxu0 0.0
    %649 = vmatpush1.msra.mxu0 0.0
    %650 = vmatprep.subr.mxu0 0.0
    %651 = vmatpush1.msra.mxu0 0.0
    %652 = vmatprep.subr.mxu0 0.0
    %653 = vmatpush1.msra.mxu0 0.0
    %654 = vmatprep.subr.mxu0 0.0
    %655 = vmatpush1.msra.mxu0 0.0
    %656 = vmatprep.subr.mxu0 0.0
    %657 = vmatpush1.msra.mxu0 0.0
    %658 = vmatprep.subr.mxu0 0.0
    %659 = vmatpush1.msra.mxu0 0.0
    %660 = vmatprep.subr.mxu0 0.0
    %661 = vmatpush1.msra.mxu0 0.0
    %662 = vmatprep.subr.mxu0 0.0
    %663 = vmatpush1.msra.mxu0 0.0
    %664 = vmatprep.subr.mxu0 0.0
    %665 = vmatpush1.msra.mxu0 0.0
    %666 = vmatprep.subr.mxu0 0.0
    %667 = vmatpush1.msra.mxu0 0.0
    %668 = vmatprep.subr.mxu0 0.0
    %669 = vmatpush1.msra.mxu0 0.0
    %670 = vmatprep.subr.mxu0 0.0
    %671 = vmatpush1.msra.mxu0 0.0
    %672 = vmatprep.subr.mxu0 0.0
    %673 = vmatpush1.msra.mxu0 0.0
    %674 = vmatprep.subr.mxu0 0.0
    %675 = vmatpush1.msra.mxu0 0.0
    %676 = vmatprep.subr.mxu0 0.0
    %677 = vmatpush1.msra.mxu0 0.0
    %678 = vmatprep.subr.mxu0 0.0
    %679 = vmatpush1.msra.mxu0 0.0
    %680 = vmatprep.mubr.f32.mxu0 0.0
    %681 = vmatmul.mubr.f32.gmra.mrb[0].mxu0 %v568
    %v682 = vpop.f32.mrb[0].mxu0
    %v683 = vadd.f32 %v609, %v682
    %v684 = vpop.f32.mrb[0].mxu0
    %v685 = vadd.f32 %v613, %v684
    %686 = vmatprep.mubr.f32.mxu0 0.0
    %687 = vmatmul.mubr.f32.gmra.mrb[0].mxu0 %v569
    %v688 = vpop.f32.mrb[0].mxu0
    %v689 = vadd.f32 %v609, %v688
    %v690 = vpop.f32.mrb[0].mxu0
    %v691 = vadd.f32 %v613, %v690
    %692 = vmatprep.mubr.f32.mxu0 0.0
    %693 = vmatmul.mubr.f32.gmra.mrb[0].mxu0 %v570
    %v694 = vpop.f32.mrb[0].mxu0
    %v695 = vadd.f32 %v609, %v694
    %v696 = vpop.f32.mrb[0].mxu0
    %v697 = vadd.f32 %v613, %v696
    %698 = vmatprep.mubr.f32.mxu0 0.0
    %699 = vmatmul.mubr.f32.gmra.mrb[0].mxu0 %v571
    %v700 = vpop.f32.mrb[0].mxu0
    %v701 = vadd.f32 %v609, %v700
    %v702 = vpop.f32.mrb[0].mxu0
    %v703 = vadd.f32 %v613, %v702
    %704 = vdwg.mxu0
    %v705 = vmax.f32 %v683, 0.0
    %v706 = vmax.f32 %v685, 0.0
    %v707 = vmax.f32 %v689, 0.0
    %v708 = vmax.f32 %v691, 0.0
    %v709 = vmax.f32 %v695, 0.0
    %v710 = vmax.f32 %v697, 0.0
    %v711 = vmax.f32 %v701, 0.0
    %v712 = vmax.f32 %v703, 0.0
    %v713 = vmin.f32 %v705, 6.0
    %v714 = vmin.f32 %v706, 6.0
    %v715 = vmin.f32 %v707, 6.0
    %v716 = vmin.f32 %v708, 6.0
    %v717 = vmin.f32 %v709, 6.0
    %v718 = vmin.f32 %v710, 6.0
    %v719 = vmin.f32 %v711, 6.0
    %v720 = vmin.f32 %v712, 6.0
    %721 = vst [vmem:[#allocation5] sm:$0xff] %v713
    %722 = vst [vmem:[#allocation5 + $0x8] sm:$0xff] %v714
    %723 = vst [vmem:[#allocation5 + $0x10] sm:$0xff] %v715
    %724 = vst [vmem:[#allocation5 + $0x18] sm:$0xff] %v716
    %725 = vst [vmem:[#allocation5 + $0x20] sm:$0xff] %v717
    %726 = vst [vmem:[#allocation5 + $0x28] sm:$0xff] %v718
    %727 = vst [vmem:[#allocation5 + $0x30] sm:$0xff] %v719
    %728 = vst [vmem:[#allocation5 + $0x38] sm:$0xff] %v720
    // Predicated region
    $region26: #{tpu_custom_call.1} parent=1 // pred_check
      _
    $region27: #{tpu_custom_call.1} parent=1 // pred_check_branch
      %730 = sbr.rel (0) target = $region29
    $region28: #{tpu_custom_call.1} parent=1 // pred_region
      %s732 = ssub.s32 1024, 1024
      %733 = vsyncadd [#allocation4], %s732
      %s734 = sshll.u32 [#allocation5], 4
      %s735 = int_to_ptr.vmem [resolvable:$true] %s734
      %740 = dma.vmem_to_hbm [thread:$0]  %s735, 1024, %s5, [#allocation4], 256, 256, 16
    $region29: #{tpu_custom_call.1} parent=1 // pred_fallthru
      _
    // Predicated region
    $region30: #{tpu_custom_call.1} parent=1 // pred_check
      _
    $region31: #{tpu_custom_call.1} parent=1 // pred_check_branch
      %742 = sbr.rel (0) target = $region33
    $region32: #{tpu_custom_call.1} parent=1 // pred_region
      %743 = dma.done [#allocation4], 1024
    $region33: #{tpu_custom_call.1} parent=1 // pred_fallthru
      _
    %744 = vsyncpa [#allocation3], 1
    %745 = vsyncpa [#allocation4], 1

</llo_original>
